<compile_context>
chip_gen: v7x
topology: tpu7x:2x2x1
jax: 0.10.0
libtpu: 0.0.40
codegen_flags: <defaults>
</compile_context>

<pallas_src>
import jax
import jax.numpy as jnp
from jax.experimental import pallas as pl
from jax.experimental.pallas import tpu as pltpu


def _repeat_channels_kernel(x_ref, o_ref):
    # x_ref: (bn, C, HW)        o_ref: (bn, cr, C, HW)
    # Broadcast along the untiled outer repeat axis: pure load -> `cr`
    # aligned full-tile stores, regardless of C's sublane alignment.
    o_ref[...] = jnp.broadcast_to(x_ref[...][:, None], o_ref.shape)


def _vmem_capacity_bytes() -> int:
    try:
        return int(pltpu.get_tpu_info().vmem_capacity_bytes)
    except Exception:
        return 64 << 20  # conservative (v7x-sized) fallback


def open_flat_layer(x: jax.Array, channels: int, *, use_pallas=None) -> jax.Array:
    """Tile x along dim 1 `channels` times (torch.Tensor.repeat semantics)."""
    N, C, H, W = x.shape
    HW = H * W
    itemsize = jnp.dtype(x.dtype).itemsize
    total_bytes = (1 + channels) * N * C * HW * itemsize

    if use_pallas is None:
        # At a few KiB the pallas_call fixed overhead dwarfs the copy; XLA's
        # tile already runs at HBM bandwidth.  The kernel pays off for large
        # tensors or as a fusion substrate.
        use_pallas = total_bytes >= (256 << 10)
    if not use_pallas:
        return jnp.tile(x, (1, channels, 1, 1))

    # ---------------- generation-specific tiling policy ----------------
    vmem_cap = _vmem_capacity_bytes()
    two_tensorcores = vmem_cap <= (64 << 20)  # v7x: 64 MiB VMEM, 2 TCs/chip
    if two_tensorcores:
        target_bytes = 12 << 20   # fused (in + out) block target
        vmem_cap_limit = 30 << 20  # stay inside v7x scoped headroom
    else:
        target_bytes = 24 << 20   # v5e/v6e: 128 MiB physical VMEM
        vmem_cap_limit = 64 << 20

    per_n_bytes = (1 + channels) * C * HW * itemsize

    # Batch block size: largest divisor of N whose fused block fits the
    # target.  On 2-TC parts prefer an even step count so the "parallel"
    # batch axis splits evenly across TensorCores.
    fitting = [d for d in range(1, N + 1)
               if N % d == 0 and d * per_n_bytes <= target_bytes]
    bn = 1
    if fitting:
        if two_tensorcores and N >= 2:
            even = [d for d in fitting if (N // d) % 2 == 0]
            multi = [d for d in fitting if (N // d) >= 2]
            bn = max(even) if even else (max(multi) if multi else max(fitting))
        else:
            bn = max(fitting)

    # Fallback: a single batch element exceeds the block target -> split the
    # repeat axis.  The input block index ignores it, so the input stays
    # resident in VMEM (HBM read stays exactly 1x).
    cr = channels
    if bn == 1 and per_n_bytes > target_bytes:
        fit_r = [d for d in range(1, channels + 1)
                 if channels % d == 0
                 and (1 + d) * C * HW * itemsize <= target_bytes]
        cr = max(fit_r) if fit_r else 1
        # TODO(synk): also tile the HW (lane) axis if even cr=1 exceeds the
        # VMEM target (e.g. enormous C*H*W); not needed for these shapes.

    grid = (N // bn, channels // cr)

    # Last two block dims equal the full array dims -> (8,128) rule satisfied
    # for any C / H / W.
    in_spec = pl.BlockSpec((bn, C, HW), lambda n, r: (n, 0, 0))
    out_spec = pl.BlockSpec((bn, cr, C, HW), lambda n, r: (n, r, 0, 0))

    # Pipeline double-buffers input and output blocks: 2 * (in + out).
    block_bytes = bn * (1 + cr) * C * HW * itemsize
    vmem_limit = int(min(max(2 * block_bytes + (1 << 20), 16 << 20),
                         vmem_cap_limit))

    out4 = pl.pallas_call(
        _repeat_channels_kernel,
        out_shape=jax.ShapeDtypeStruct((N, channels, C, HW), x.dtype),
        grid_spec=pltpu.PrefetchScalarGridSpec(
            num_scalar_prefetch=0,
            grid=grid,
            in_specs=[in_spec],
            out_specs=out_spec,
        ),
        compiler_params=pltpu.CompilerParams(
            dimension_semantics=("parallel", "arbitrary"),
            vmem_limit_bytes=vmem_limit,
        ),
        cost_estimate=pl.CostEstimate(
            flops=0, transcendentals=0, bytes_accessed=total_bytes),
    )(x.reshape(N, C, HW))

    # (N, channels, C, HW) -> (N, channels*C, H, W): contiguous, free.
    return out4.reshape(N, channels * C, H, W)


if __name__ == "__main__":
    key = jax.random.PRNGKey(0)
    N, C, H, W = 2, 4, 16, 16
    channels = 3  # repeat factor of OpenFlatLayer(channels)

    x = jax.random.normal(key, (N, C, H, W), dtype=jnp.float32)

    # Force the Pallas path so the kernel itself is exercised (the wrapper
    # would otherwise dispatch this tiny problem to jnp.tile).
    out = open_flat_layer(x, channels, use_pallas=True)
    out = jax.block_until_ready(out)

    # Reference: torch's x.repeat([1, channels, 1, 1]) == jnp.tile along dim 1.
    ref = jnp.tile(x, (1, channels, 1, 1))

    assert out.shape == (N, C * channels, H, W), out.shape
    assert out.dtype == x.dtype
    assert jnp.array_equal(out, ref), "mismatch vs reference tile"

    print("KERNEL_OK")
</pallas_src>

<mosaic_0001>
module attributes {stable_mosaic.version = 11 : i64} {
  func.func @_repeat_channels_kernel(%arg0: i32, %arg1: i32, %arg2: memref<1x4x256xf32, #tpu.memory_space<vmem>>, %arg3: memref<1x3x4x256xf32, #tpu.memory_space<vmem>>) attributes {dimension_semantics = [#tpu.dimension_semantics<parallel>, #tpu.dimension_semantics<arbitrary>], iteration_bounds = array<i64: 2, 1>, scalar_prefetch = 0 : i64, scratch_operands = 0 : i64, tpu.core_type = #tpu.core_type<tc>, window_params = [{transform_indices = @transform_0, window_bounds = array<i64: 1, 4, 256>}, {transform_indices = @transform_1, window_bounds = array<i64: 1, 3, 4, 256>}]} {
    %c0 = arith.constant 0 : index
    %c0_0 = arith.constant 0 : index
    %c0_1 = arith.constant 0 : index
    %0 = vector.load %arg2[%c0, %c0_0, %c0_1] : memref<1x4x256xf32, #tpu.memory_space<vmem>>, vector<1x4x256xf32>
    %1 = vector.shape_cast %0 : vector<1x4x256xf32> to vector<1x1x4x256xf32>
    %2 = vector.shape_cast %1 : vector<1x1x4x256xf32> to vector<1x1x4x256xf32>
    %3 = vector.broadcast %2 : vector<1x1x4x256xf32> to vector<1x3x4x256xf32>
    %c0_2 = arith.constant 0 : index
    %c0_3 = arith.constant 0 : index
    %c0_4 = arith.constant 0 : index
    %c0_5 = arith.constant 0 : index
    %4 = vector.load %arg3[%c0_2, %c0_3, %c0_4, %c0_5] : memref<1x3x4x256xf32, #tpu.memory_space<vmem>>, vector<1x3x4x256xf32>
    tpu.vector_store %arg3[%c0_2, %c0_3, %c0_4, %c0_5], %3 {strides = array<i32>} : memref<1x3x4x256xf32, #tpu.memory_space<vmem>>, vector<1x3x4x256xf32>,
    return
  }
  func.func @transform_0(%arg0: i32, %arg1: i32) -> (i32, i32, i32) {
    %c0_i32 = arith.constant 0 : i32
    %c0_i32_0 = arith.constant 0 : i32
    %c0_i32_1 = arith.constant 0 : i32
    return %arg0, %c0_i32, %c0_i32_0 : i32, i32, i32
  }
  func.func @transform_1(%arg0: i32, %arg1: i32) -> (i32, i32, i32, i32) {
    %c0_i32 = arith.constant 0 : i32
    %c0_i32_0 = arith.constant 0 : i32
    %c0_i32_1 = arith.constant 0 : i32
    return %arg0, %arg1, %c0_i32, %c0_i32_0 : i32, i32, i32, i32
  }
}

</mosaic_0001>

<llo_original>
// kernel: tpu_custom_call.1
$region0: #{tpu_custom_call.1}
  #allocation0 [shape = 'u32[]', space=smem, size = 0x4, offset = 0x4, fixed_abs, tag = 'smem constant byte address 0x4 - core index']
  #allocation1 [shape = 'u32[144,128]{1,0:T(1,128)}', space=vmem, size = 0x12000, scoped, tag = 'internal scratch']
  %s0 = inlined_call_operand.hbm [shape: f32[2,4,256], index: 0, kind: input, shape index: {}]
  %s1 = inlined_call_operand.hbm [shape: f32[2,3,4,256], index: 1, kind: output, shape index: {}]
  %s2 = sld [smem:[#allocation0]]
  $region41: #{tpu_custom_call.1} parent=0
    _
  %s4 = ssub.s32 1, %s2
  %s5 = scalar_select 0, %s4, %s2
  $region1: #{tpu_custom_call.1} parent=0
    #allocation2 [shape = 'u8[8192]{0}', space=vmem, size = 0x2000, scoped, tag = 'input window, operand 0']
    #allocation3 [shape = 's32[2]{0}', space=sflag, size = 0x8, scoped, tag = 'scoped memory for tpu_custom_call.1']
    #allocation4 [shape = 's32[2]{0}', space=sflag, size = 0x8, scoped, tag = 'scoped memory for tpu_custom_call.1']
    #allocation5 [shape = 'u8[24576]{0}', space=vmem, size = 0x6000, scoped, tag = 'output window, operand 0']
    %6 = vsyncpa [#allocation3], 0
    %s7 = scalar_lea.sflag [#allocation3], 1
    %8 = vsyncpa %s7, 0
    %9 = vsyncpa [#allocation4], 0
    %s10 = scalar_lea.sflag [#allocation4], 1
    %11 = vsyncpa %s10, 0
    loop: start=0, step=1, limit=4
    $region2: #{tpu_custom_call.1} parent=1 // loop_pre_header
      _
    $region3: #{tpu_custom_call.1} parent=1 // loop_header
      %s13 = sphi 0, %s17
      %p14 = scmp.ge.s32.totalorder %s13, 4
      %s20 = sphi 0, %s32
      %s21 = sphi 0, %s28
      %s22 = sphi 0, %s20
      %s23 = sphi 0, %s21
      %s24 = sphi 0, %s22
      %s25 = sphi 0, %s23
      %s35 = sphi 0, %s37
      %s38 = sphi 0, %s35
      %s39 = sphi 0, %s38
      %s55 = sphi 0, %s39
      %s63 = sphi 0, %s65
      %s66 = sphi 0, %s63
      %s67 = sphi 0, %s66
      %s83 = sphi 0, %s67
    $region4: #{tpu_custom_call.1} parent=1 // loop_header_branch
      %16 = sbr.rel (%p14) target = $region8
    $region5: #{tpu_custom_call.1} parent=1 // loop_body
      %s18 = ssub.s32 %s13, 1
      %s19 = ssub.s32 %s13, 2
      %s26 = sadd.s32 1, %s21
      %p27 = scmp.ge.s32.totalorder %s26, 1
      %s28 = scalar_select %p27, 0, %s26
      %s29 = sadd.s32 1, %s20
      %s30 = scalar_select %p27, %s29, %s20
      %p31 = scmp.ge.s32.totalorder %s30, 2
      %s32 = scalar_select %p31, 0, %s30
      %s33 = ssub.s32 %s20, %s32
      %p34 = scmp.eq.s32.totalorder %s33, 0
      %s36 = sadd.s32 %s35, 1
      %s37 = scalar_select %p34, %s35, %s36
      %p40 = pneg %p34
      %p41 = scmp.eq.s32.totalorder %s13, 1
      %p42 = por %p40, %p41
      %p43 = scmp.ne.s32.totalorder %s35, %s38
      %p44 = scmp.eq.s32.totalorder %s13, 0
      %p45 = por %p43, %p44
      %p46 = scmp.ne.s32.totalorder %s35, %s38
      %p47 = scmp.eq.s32.totalorder %s18, 1
      %p48 = por %p46, %p47
      %p49 = scmp.ne.s32.totalorder %s38, %s39
      %p50 = scmp.eq.s32.totalorder %s18, 0
      %p51 = por %p49, %p50
      %p52 = scmp.ne.s32.totalorder %s38, %s39
      %p53 = scmp.eq.s32.totalorder %s19, 1
      %p54 = por %p52, %p53
      %p56 = scmp.ne.s32.totalorder %s39, %s55
      %p57 = scmp.eq.s32.totalorder %s19, 0
      %p58 = por %p56, %p57
      %s59 = ssub.s32 %s20, %s32
      %s60 = ssub.s32 %s21, %s28
      %s61 = sor.u32 %s59, %s60
      %p62 = scmp.eq.s32.totalorder %s61, 0
      %s64 = sadd.s32 %s63, 1
      %s65 = scalar_select %p62, %s63, %s64
      %p68 = pneg %p62
      %p69 = scmp.eq.s32.totalorder %s13, 1
      %p70 = por %p68, %p69
      %p71 = scmp.ne.s32.totalorder %s63, %s66
      %p72 = scmp.eq.s32.totalorder %s13, 0
      %p73 = por %p71, %p72
      %p74 = scmp.ne.s32.totalorder %s63, %s66
      %p75 = scmp.eq.s32.totalorder %s18, 1
      %p76 = por %p74, %p75
      %p77 = scmp.ne.s32.totalorder %s66, %s67
      %p78 = scmp.eq.s32.totalorder %s18, 0
      %p79 = por %p77, %p78
      %p80 = scmp.ne.s32.totalorder %s66, %s67
      %p81 = scmp.eq.s32.totalorder %s19, 1
      %p82 = por %p80, %p81
      %p84 = scmp.ne.s32.totalorder %s67, %s83
      %p85 = scmp.eq.s32.totalorder %s19, 0
      %p86 = por %p84, %p85
      %p87 = scmp.le.s32.totalorder 1, %s13
      %p88 = scmp.lt.s32.totalorder %s13, 3
      %p89 = pnand %p87, %p88
      %p90 = pneg %p89
      // Predicated region
      $region9: #{tpu_custom_call.1} parent=5 // pred_check
        _
      $region10: #{tpu_custom_call.1} parent=5 // pred_check_branch
        %92 = sbr.rel (%p89) target = $region12
      $region11: #{tpu_custom_call.1} parent=5 // pred_region
        %s93 = ssub.s32 %s13, 1
      $region12: #{tpu_custom_call.1} parent=5 // pred_fallthru
        _
      %p94 = scmp.lt.s32.totalorder %s13, 2
      // Predicated region
      $region13: #{tpu_custom_call.1} parent=5 // pred_check
        %p95 = pneg %p94
      $region14: #{tpu_custom_call.1} parent=5 // pred_check_branch
        %97 = sbr.rel (%p95) target = $region16
      $region15: #{tpu_custom_call.1} parent=5 // pred_region
        // Predicated region
        $region17: #{tpu_custom_call.1} parent=15 // pred_check
          %p98 = pneg %p45
        $region18: #{tpu_custom_call.1} parent=15 // pred_check_branch
          %100 = sbr.rel (%p98) target = $region20
        $region19: #{tpu_custom_call.1} parent=15 // pred_region
          %s101 = sand.u32 %s35, 1
          %s102 = scalar_lea.sflag [#allocation3], %s101
          %s103 = sand.u32 %s35, 1
          %s104 = smul.addr %s103, 8
          %s105 = scalar_lea.vmem [#allocation2], %s104
          %s107 = ssub.s32 128, 128
          %108 = vsyncadd %s102, %s107
          %s109 = smul.addr %s20, 2
          %s110 = smul.addr %s109, 64
          %s111 = scalar_lea.hbm %s0, %s110
          %s113 = sshll.u32 %s105, 4
          %s114 = int_to_ptr.vmem [resolvable:$true] %s113
          %116 = dma.hbm_to_vmem [thread:$0]  %s111, 128, %s114, %s102
        $region20: #{tpu_custom_call.1} parent=15 // pred_fallthru
          _
      $region16: #{tpu_custom_call.1} parent=5 // pred_fallthru
        _
      %p117 = scmp.le.s32.totalorder 1, %s13
      %p118 = scmp.lt.s32.totalorder %s13, 3
      %p119 = pnand %p117, %p118
      %p120 = pneg %p119
      // Predicated region
      $region21: #{tpu_custom_call.1} parent=5 // pred_check
        _
      $region22: #{tpu_custom_call.1} parent=5 // pred_check_branch
        %122 = sbr.rel (%p119) target = $region24
      $region23: #{tpu_custom_call.1} parent=5 // pred_region
        %s123 = ssub.s32 %s13, 1
        %s124 = sand.u32 %s38, 1
        %s125 = scalar_lea.sflag [#allocation3], %s124
        %s126 = sand.u32 %s38, 1
        %s127 = smul.addr %s126, 8
        %s128 = scalar_lea.vmem [#allocation2], %s127
        // Predicated region
        $region25: #{tpu_custom_call.1} parent=23 // pred_check
          %p129 = pneg %p51
        $region26: #{tpu_custom_call.1} parent=23 // pred_check_branch
          %131 = sbr.rel (%p129) target = $region28
        $region27: #{tpu_custom_call.1} parent=23 // pred_region
          %132 = dma.done %s125, 128
        $region28: #{tpu_custom_call.1} parent=23 // pred_fallthru
          _
        %s133 = sand.u32 %s38, 1
        %s134 = scalar_lea.sflag [#allocation3], %s133
        %s135 = sand.u32 %s38, 1
        %s136 = smul.addr %s135, 8
        %s137 = scalar_lea.vmem [#allocation2], %s136
        %p138 = pneg %p51
        %p139 = pneg %p48
        %p140 = pneg %p79
        %p141 = pneg %p76
        %s142 = sand.u32 %s66, 1
        %s143 = scalar_lea.sflag [#allocation4], %s142
        %s144 = sand.u32 %s66, 1
        %s145 = smul.addr %s144, 24
        %s146 = scalar_lea.vmem [#allocation5], %s145
        %s147 = smul.u32 3, %s23
        %v148 = vld [vmem:[%s128] sm:$0xff]
        %149 = vst [vmem:[%s146] sm:$0xff] %v148
        %150 = vst [vmem:[%s146 + $0x8] sm:$0xff] %v148
        %151 = vst [vmem:[%s146 + $0x10] sm:$0xff] %v148
        %s152 = sand.u32 %s66, 1
        %s153 = scalar_lea.sflag [#allocation4], %s152
        %s154 = sand.u32 %s66, 1
        %s155 = smul.addr %s154, 24
        %s156 = scalar_lea.vmem [#allocation5], %s155
        // Predicated region
        $region29: #{tpu_custom_call.1} parent=23 // pred_check
          %p157 = pneg %p76
        $region30: #{tpu_custom_call.1} parent=23 // pred_check_branch
          %159 = sbr.rel (%p157) target = $region32
        $region31: #{tpu_custom_call.1} parent=23 // pred_region
          %s160 = smul.u32 3, %s23
          %s162 = ssub.s32 384, 384
          %163 = vsyncadd %s153, %s162
          %s164 = smul.addr %s160, 2
          %s165 = smul.addr %s22, 6
          %s166 = sadd.s32 %s164, %s165
          %s167 = smul.addr %s166, 64
          %s168 = scalar_lea.hbm %s1, %s167
          %s169 = sshll.u32 %s156, 4
          %s170 = int_to_ptr.vmem [resolvable:$true] %s169
          %175 = dma.vmem_to_hbm [thread:$0]  %s170, 384, %s168, %s153, 128, 128, 8
        $region32: #{tpu_custom_call.1} parent=23 // pred_fallthru
          _
      $region24: #{tpu_custom_call.1} parent=5 // pred_fallthru
        _
      %p176 = scmp.le.s32.totalorder 2, %s13
      // Predicated region
      $region33: #{tpu_custom_call.1} parent=5 // pred_check
        %p177 = pneg %p176
      $region34: #{tpu_custom_call.1} parent=5 // pred_check_branch
        %179 = sbr.rel (%p177) target = $region36
      $region35: #{tpu_custom_call.1} parent=5 // pred_region
        %s180 = ssub.s32 %s13, 2
        // Predicated region
        $region37: #{tpu_custom_call.1} parent=35 // pred_check
          %p181 = pneg %p82
        $region38: #{tpu_custom_call.1} parent=35 // pred_check_branch
          %183 = sbr.rel (%p181) target = $region40
        $region39: #{tpu_custom_call.1} parent=35 // pred_region
          %s184 = sand.u32 %s67, 1
          %s185 = scalar_lea.sflag [#allocation4], %s184
          %s186 = sand.u32 %s67, 1
          %s187 = smul.addr %s186, 24
          %s188 = scalar_lea.vmem [#allocation5], %s187
          %189 = dma.done %s185, 384
        $region40: #{tpu_custom_call.1} parent=35 // pred_fallthru
          _
      $region36: #{tpu_custom_call.1} parent=5 // pred_fallthru
        _
    $region6: #{tpu_custom_call.1} parent=1 // loop_footer
      %s17 = sadd.s32 1, %s13
    $region7: #{tpu_custom_call.1} parent=1 // loop_footer_branch
      %12 = sbr.rel target = $region3
    $region8: #{tpu_custom_call.1} parent=1 // loop_exit
      _
    %190 = vsyncpa [#allocation3], 1
    %s191 = scalar_lea.sflag [#allocation3], 1
    %192 = vsyncpa %s191, 1
    %193 = vsyncpa [#allocation4], 1
    %s194 = scalar_lea.sflag [#allocation4], 1
    %195 = vsyncpa %s194, 1

</llo_original>
